<compile_context>
chip_gen: v7x
topology: tpu7x:2x2x1
jax: 0.10.0
libtpu: 0.0.40
codegen_flags: <defaults>
</compile_context>

<pallas_src>
import numpy as np
import jax
import jax.numpy as jnp
from jax.experimental import pallas as pl
from jax.experimental.pallas import tpu as pltpu


def _round_up(a, b):
    return (a + b - 1) // b * b


def _vmem_block_budget_bytes():
    """Byte budget for one input block (double-buffered by Pallas), safe on all chips."""
    cap = None
    try:
        cap = getattr(pltpu.get_tpu_info(), "vmem_capacity_bytes", None)
    except Exception:
        cap = None
    if not cap:
        cap = 64 << 20  # v7x per-TensorCore VMEM (smallest of v5e/v6e/v7x)
    # 2x double-buffered input + outputs + resident pmat must sit comfortably inside the
    # default scoped-VMEM window (16 MiB on v5e, 32 MiB on v6e/v7x) -> cap at 4 MiB.
    return max(1 << 20, min(4 << 20, cap // 16))


def _choose_row_tile(n_rows, hw, elem_bytes):
    """Rows per grid step: big enough to approach HBM roofline, split for 2 v7x TCs."""
    target = _vmem_block_budget_bytes()
    tm = max(8, (target // (hw * elem_bytes)) // 8 * 8)
    if n_rows >= 16 and tm >= n_rows:
        # Would otherwise be a single tile: split in two so the "parallel" grid axis can
        # shard across both v7x TensorCores (and still pipelines on v5e/v6e).
        tm = _round_up(-(-n_rows // 2), 8)
    if tm >= n_rows:
        return n_rows           # one full-extent tile (full-dim block is always legal)
    return tm                   # multiple of 8; ragged tail rows are masked by Pallas


def _make_rows_kernel(inv_temp, apply_temp):
    def kernel(x_ref, pmat_ref, out_ref):
        x = x_ref[...].astype(jnp.float32)                      # (TM, HW)
        if apply_temp:                                          # skipped when T == 1.0
            x = x * inv_temp
        m = jnp.max(x, axis=-1, keepdims=True)
        e = jnp.exp(x - m)
        s = jnp.sum(e, axis=-1, keepdims=True)
        # Every spatial moment from ONE MXU matmul; normalize AFTER the matmul on the
        # narrow (TM, F) result instead of materializing attn = e / s over (TM, HW).
        moments = jnp.dot(e, pmat_ref[...], preferred_element_type=jnp.float32)
        out_ref[...] = (moments / s).astype(out_ref.dtype)
    return kernel


def spatial_softmax_rows_pallas(rows, pmat, *, inv_temp):
    """rows: (N, H*W); pmat: (H*W, F) f32 -> normalized spatial moments (N, F) f32."""
    n, hw = rows.shape
    f = pmat.shape[1]
    tm = _choose_row_tile(n, hw, rows.dtype.itemsize)
    grid = (pl.cdiv(n, tm),)
    kernel = _make_rows_kernel(float(inv_temp), float(inv_temp) != 1.0)
    return pl.pallas_call(
        kernel,
        out_shape=jax.ShapeDtypeStruct((n, f), jnp.float32),
        grid=grid,
        in_specs=[
            pl.BlockSpec((tm, hw), lambda i: (i, 0)),
            pl.BlockSpec((hw, f), lambda i: (0, 0)),   # same block each step -> resident
        ],
        out_specs=pl.BlockSpec((tm, f), lambda i: (i, 0)),
        compiler_params=pltpu.CompilerParams(dimension_semantics=("parallel",)),
    )(rows, pmat)


def _fused_conv_kernel(x_ref, w_ref, b_ref, pmat_ref, out_ref):
    # x_ref: (1, C, HW)  w_ref: (K, C)  b_ref: (K, 1)  pmat_ref: (HW, F)  out_ref: (1, K, F)
    x = x_ref[0].astype(jnp.float32)                                        # (C, HW)
    logits = jnp.dot(w_ref[...], x, preferred_element_type=jnp.float32) + b_ref[...]
    m = jnp.max(logits, axis=-1, keepdims=True)
    e = jnp.exp(logits - m)
    s = jnp.sum(e, axis=-1, keepdims=True)
    moments = jnp.dot(e, pmat_ref[...], preferred_element_type=jnp.float32)  # (K, F)
    out_ref[0] = (moments / s).astype(out_ref.dtype)


def spatial_softmax_fused_conv_pallas(feature, w, b, pmat, *, inv_temp):
    """feature: (B, C, H*W); w: (K, C); b: (K,) -> moments of softmax((w@x+b)/T), (B, K, F)."""
    bsz, c, hw = feature.shape
    k = w.shape[0]
    f = pmat.shape[1]
    # Fold temperature into the conv params: softmax((w@x+b)/T) == softmax((w/T)@x + b/T).
    w_t = (w * inv_temp).astype(jnp.float32)
    b_t = (b * inv_temp).astype(jnp.float32).reshape(k, 1)
    return pl.pallas_call(
        _fused_conv_kernel,
        out_shape=jax.ShapeDtypeStruct((bsz, k, f), jnp.float32),
        grid=(bsz,),
        in_specs=[
            pl.BlockSpec((1, c, hw), lambda i: (i, 0, 0)),
            pl.BlockSpec((k, c), lambda i: (0, 0)),      # resident conv weight
            pl.BlockSpec((k, 1), lambda i: (0, 0)),      # resident conv bias
            pl.BlockSpec((hw, f), lambda i: (0, 0)),     # resident position matrix
        ],
        out_specs=pl.BlockSpec((1, k, f), lambda i: (i, 0, 0)),
        compiler_params=pltpu.CompilerParams(dimension_semantics=("parallel",)),
    )(feature, w_t, b_t, pmat)


def _moments_to_outputs(m, output_variance):
    """m: (..., F) normalized moments [Ex, Ey (, Exx, Eyy, Exy)] -> kp (, cov)."""
    kp = m[..., 0:2]
    if not output_variance:
        return kp, None
    ex = m[..., 0]
    ey = m[..., 1]
    var_x = m[..., 2] - ex * ex
    var_y = m[..., 3] - ey * ey
    var_xy = m[..., 4] - ex * ey
    cov = jnp.stack([var_x, var_xy, var_xy, var_y], axis=-1)
    return kp, cov.reshape(m.shape[:-1] + (2, 2))


class SpatialSoftmax:
    """JAX/Pallas equivalent of the PyTorch SpatialSoftmax (eval-mode forward)."""

    def __init__(self, input_shape, num_kp=None, temperature=1.0,
                 learnable_temperature=False, output_variance=False,
                 noise_std=0.0, key=None):
        assert len(input_shape) == 3
        self._in_c, self._in_h, self._in_w = input_shape
        # learnable_temperature only affects training; the value itself is honored.
        self.temperature = float(temperature)
        self.output_variance = bool(output_variance)
        self.noise_std = float(noise_std)

        if num_kp is not None:
            self._num_kp = int(num_kp)
            key = jax.random.PRNGKey(0) if key is None else key
            kw, kb = jax.random.split(key)
            bound = 1.0 / np.sqrt(self._in_c)
            # 1x1 Conv2d == per-pixel channel matmul; weight (K, C), bias (K,).
            self.conv_weight = jax.random.uniform(
                kw, (self._num_kp, self._in_c), minval=-bound, maxval=bound,
                dtype=jnp.float32)
            self.conv_bias = jax.random.uniform(
                kb, (self._num_kp,), minval=-bound, maxval=bound, dtype=jnp.float32)
        else:
            self._num_kp = self._in_c
            self.conv_weight = None
            self.conv_bias = None

        # [-1, 1] pixel-coordinate grid, flattened row-major (matches the torch buffers).
        pos_x, pos_y = np.meshgrid(np.linspace(-1.0, 1.0, self._in_w),
                                   np.linspace(-1.0, 1.0, self._in_h))
        px = pos_x.reshape(-1).astype(np.float32)
        py = pos_y.reshape(-1).astype(np.float32)
        cols = [px, py]
        if self.output_variance:
            cols += [px * px, py * py, px * py]
        # NOTE: F <= 5 keeps the moments output tiny; deliberately NOT padded to 128
        # lanes (output bytes would then rival input bytes on this mem-bound op).
        self._pmat = jnp.asarray(np.stack(cols, axis=1))      # (H*W, F)

    def output_shape(self, input_shape):
        assert len(input_shape) == 3 and input_shape[0] == self._in_c
        return [self._num_kp, 2]

    def __call__(self, feature):
        b, c, h, w = feature.shape
        assert (c, h, w) == (self._in_c, self._in_h, self._in_w)
        inv_temp = 1.0 / self.temperature
        if self.conv_weight is not None:
            # Fused 1x1-conv + spatial softmax: the (B, K, H, W) conv activation never
            # touches HBM (saves one full write + one full read of that tensor).
            moments = spatial_softmax_fused_conv_pallas(
                feature.reshape(b, c, h * w), self.conv_weight, self.conv_bias,
                self._pmat, inv_temp=inv_temp)                 # (B, K, F)
        else:
            rows = feature.reshape(b * self._num_kp, h * w)    # no-copy reshape
            moments = spatial_softmax_rows_pallas(rows, self._pmat, inv_temp=inv_temp)
            moments = moments.reshape(b, self._num_kp, -1)
        kp, cov = _moments_to_outputs(moments, self.output_variance)
        # TODO(synk): training-mode Gaussian keypoint noise (noise_std * randn) and a
        # learnable temperature parameter are not modeled; this is the eval-mode forward.
        if self.output_variance:
            return kp, cov
        return kp


def _spatial_softmax_reference(feature, temperature, conv_weight=None,
                               conv_bias=None, output_variance=False):
    """float64 numpy port of the PyTorch forward (eval mode)."""
    x = np.asarray(feature, dtype=np.float64)
    if conv_weight is not None:
        x = (np.einsum('kc,bchw->bkhw', np.asarray(conv_weight, np.float64), x)
             + np.asarray(conv_bias, np.float64)[None, :, None, None])
    b, k, h, w = x.shape
    pos_x, pos_y = np.meshgrid(np.linspace(-1.0, 1.0, w), np.linspace(-1.0, 1.0, h))
    px = pos_x.reshape(-1)
    py = pos_y.reshape(-1)
    rows = x.reshape(b * k, h * w) / float(temperature)
    rows = rows - rows.max(axis=1, keepdims=True)
    e = np.exp(rows)
    attn = e / e.sum(axis=1, keepdims=True)
    ex = (attn * px).sum(axis=1, keepdims=True)
    ey = (attn * py).sum(axis=1, keepdims=True)
    kp = np.concatenate([ex, ey], axis=1).reshape(b, k, 2)
    if not output_variance:
        return kp
    exx = (attn * px * px).sum(axis=1, keepdims=True)
    eyy = (attn * py * py).sum(axis=1, keepdims=True)
    exy = (attn * px * py).sum(axis=1, keepdims=True)
    var_x = exx - ex * ex
    var_y = eyy - ey * ey
    var_xy = exy - ex * ey
    cov = np.concatenate([var_x, var_xy, var_xy, var_y], axis=1).reshape(b, k, 2, 2)
    return kp, cov


if __name__ == "__main__":
    B, C, H, W = 2, 4, 16, 16
    key = jax.random.PRNGKey(0)
    kx, kconv = jax.random.split(key)
    x = jax.random.normal(kx, (B, C, H, W), dtype=jnp.float32)

    # 1) default path: num_kp=None, no variance, temperature=1.0
    mod = SpatialSoftmax((C, H, W))
    kp = jax.block_until_ready(mod(x))
    assert kp.shape == (B, C, 2)
    ref_kp = _spatial_softmax_reference(x, temperature=1.0)
    np.testing.assert_allclose(np.asarray(kp, np.float64), ref_kp,
                               rtol=1e-4, atol=1e-5)

    # 2) output_variance=True, non-trivial temperature
    mod_var = SpatialSoftmax((C, H, W), temperature=0.75, output_variance=True)
    kp2, cov2 = mod_var(x)
    kp2 = jax.block_until_ready(kp2)
    cov2 = jax.block_until_ready(cov2)
    assert kp2.shape == (B, C, 2) and cov2.shape == (B, C, 2, 2)
    ref_kp2, ref_cov2 = _spatial_softmax_reference(x, temperature=0.75,
                                                   output_variance=True)
    np.testing.assert_allclose(np.asarray(kp2, np.float64), ref_kp2,
                               rtol=1e-4, atol=1e-5)
    np.testing.assert_allclose(np.asarray(cov2, np.float64), ref_cov2,
                               rtol=1e-4, atol=1e-5)

    # 3) num_kp (fused 1x1 conv head) path
    K = 6
    mod_kp = SpatialSoftmax((C, H, W), num_kp=K, temperature=0.5, key=kconv)
    kp3 = jax.block_until_ready(mod_kp(x))
    assert kp3.shape == (B, K, 2)
    ref_kp3 = _spatial_softmax_reference(x, temperature=0.5,
                                         conv_weight=mod_kp.conv_weight,
                                         conv_bias=mod_kp.conv_bias)
    np.testing.assert_allclose(np.asarray(kp3, np.float64), ref_kp3,
                               rtol=1e-4, atol=1e-5)

    print("KERNEL_OK")
</pallas_src>

<mosaic_0001>
module attributes {stable_mosaic.version = 11 : i64} {
  func.func @kernel(%arg0: i32, %arg1: memref<8x256xf32, #tpu.memory_space<vmem>>, %arg2: memref<256x2xf32, #tpu.memory_space<vmem>>, %arg3: memref<8x2xf32, #tpu.memory_space<vmem>>) attributes {dimension_semantics = [#tpu.dimension_semantics<parallel>], iteration_bounds = array<i64: 1>, scalar_prefetch = 0 : i64, scratch_operands = 0 : i64, tpu.core_type = #tpu.core_type<tc>, window_params = [{transform_indices = @transform_0, window_bounds = array<i64: 8, 256>}, {pipeline_mode = #tpu.pipeline_mode<synchronous>, transform_indices = @transform_1, window_bounds = array<i64: 256, 2>}, {transform_indices = @transform_2, window_bounds = array<i64: 8, 2>}]} {
    %c0 = arith.constant 0 : index
    %c0_0 = arith.constant 0 : index
    %0 = vector.load %arg1[%c0, %c0_0] : memref<8x256xf32, #tpu.memory_space<vmem>>, vector<8x256xf32>
    %cst = arith.constant dense<0xFF800000> : vector<8xf32>
    %1 = vector.multi_reduction <maximumf>, %0, %cst [1] : vector<8x256xf32> to vector<8xf32>
    %2 = vector.shape_cast %1 : vector<8xf32> to vector<8x1xf32>
    %3 = vector.broadcast %2 : vector<8x1xf32> to vector<8x256xf32>
    %4 = arith.subf %0, %3 : vector<8x256xf32>
    %5 = math.exp %4 : vector<8x256xf32>
    %cst_1 = arith.constant dense<0.000000e+00> : vector<8xf32>
    %6 = vector.multi_reduction <add>, %5, %cst_1 [1] : vector<8x256xf32> to vector<8xf32>
    %7 = vector.shape_cast %6 : vector<8xf32> to vector<8x1xf32>
    %c0_2 = arith.constant 0 : index
    %c0_3 = arith.constant 0 : index
    %8 = vector.load %arg2[%c0_2, %c0_3] : memref<256x2xf32, #tpu.memory_space<vmem>>, vector<256x2xf32>
    %cst_4 = arith.constant dense<0.000000e+00> : vector<8x2xf32>
    %9 = tpu.matmul %5, %8, %cst_4 {dimension_numbers = #tpu.dot_dimension_numbers<[1], [0], [0], [1], [0, 0, 1, 1], [], []>} : vector<8x256xf32>, vector<256x2xf32>, vector<8x2xf32> -> vector<8x2xf32>
    %10 = vector.broadcast %7 : vector<8x1xf32> to vector<8x2xf32>
    %11 = arith.divf %9, %10 : vector<8x2xf32>
    %c0_5 = arith.constant 0 : index
    %c0_6 = arith.constant 0 : index
    %12 = vector.load %arg3[%c0_5, %c0_6] : memref<8x2xf32, #tpu.memory_space<vmem>>, vector<8x2xf32>
    tpu.vector_store %arg3[%c0_5, %c0_6], %11 {strides = array<i32>} : memref<8x2xf32, #tpu.memory_space<vmem>>, vector<8x2xf32>,
    return
  }
  func.func @transform_0(%arg0: i32) -> (i32, i32) {
    %c0_i32 = arith.constant 0 : i32
    %c0_i32_0 = arith.constant 0 : i32
    return %arg0, %c0_i32 : i32, i32
  }
  func.func @transform_1(%arg0: i32) -> (i32, i32) {
    %c0_i32 = arith.constant 0 : i32
    %c0_i32_0 = arith.constant 0 : i32
    %c0_i32_1 = arith.constant 0 : i32
    return %c0_i32, %c0_i32_0 : i32, i32
  }
  func.func @transform_2(%arg0: i32) -> (i32, i32) {
    %c0_i32 = arith.constant 0 : i32
    %c0_i32_0 = arith.constant 0 : i32
    return %arg0, %c0_i32 : i32, i32
  }
}

</mosaic_0001>

<llo_original>
// kernel: tpu_custom_call.1
$region0: #{tpu_custom_call.1}
  #allocation0 [shape = 'u32[]', space=smem, size = 0x4, offset = 0x4, fixed_abs, tag = 'smem constant byte address 0x4 - core index']
  #allocation1 [shape = 'u32[144,128]{1,0:T(1,128)}', space=vmem, size = 0x12000, scoped, tag = 'internal scratch']
  %s0 = inlined_call_operand.vmem [shape: f32[8,256], index: 0, kind: input, shape index: {}]
  %s1 = inlined_call_operand.vmem [shape: f32[256,2], index: 1, kind: input, shape index: {}]
  %s2 = inlined_call_operand.vmem [shape: f32[8,2], index: 2, kind: output, shape index: {}]
  %s3 = sld [smem:[#allocation0]]
  $region18: #{tpu_custom_call.1} parent=0
    _
  %s5 = ssub.s32 1, %s3
  %s6 = scalar_select 0, %s5, %s3
  // Predicated region
  $region2: #{tpu_custom_call.1} parent=0 // pred_check
    _
  $region3: #{tpu_custom_call.1} parent=0 // pred_check_branch
    %8 = sbr.rel (0) target = $region5
  $region4: #{tpu_custom_call.1} parent=0 // pred_region
    _
  $region5: #{tpu_custom_call.1} parent=0 // pred_fallthru
    _
  // Predicated region
  $region6: #{tpu_custom_call.1} parent=0 // pred_check
    _
  $region7: #{tpu_custom_call.1} parent=0 // pred_check_branch
    %10 = sbr.rel (0) target = $region9
  $region8: #{tpu_custom_call.1} parent=0 // pred_region
    _
  $region9: #{tpu_custom_call.1} parent=0 // pred_fallthru
    _
  %v11 = vld [vmem:[%s0] sm:$0xff]
  %v12 = vld [vmem:[%s0 + $0x8] sm:$0xff]
  %v13 = vmax.f32 %v11, %v12
  %14 = vmax.xlane.f32.xlu0 %v13
  %v15 = vpop.xlane.xlu0 %14
  %v16 = vsub.f32 %v11, %v15
  %v17 = vsub.f32 %v12, %v15
  %v18 = vmul.f32 %v16, 1.442695
  %v19 = vpow.pop %v18
  %v20 = vmul.f32 %v17, 1.442695
  %v21 = vpow.pop %v20
  %v22 = vadd.f32 %v19, %v21
  %23 = vadd.xlane.f32.xlu0 %v22
  %v24 = vpop.xlane.xlu0 %23
  %v25 = vld [vmem:[%s1] sm:$0xff]
  %v26 = vld [vmem:[%s1 + $0x8] sm:$0xff]
  %v27 = vld [vmem:[%s1 + $0x10] sm:$0xff]
  %v28 = vld [vmem:[%s1 + $0x18] sm:$0xff]
  %v29 = vld [vmem:[%s1 + $0x20] sm:$0xff]
  %v30 = vld [vmem:[%s1 + $0x28] sm:$0xff]
  %v31 = vld [vmem:[%s1 + $0x30] sm:$0xff]
  %v32 = vld [vmem:[%s1 + $0x38] sm:$0xff]
  %v33 = vld [vmem:[%s1 + $0x40] sm:$0xff]
  %v34 = vld [vmem:[%s1 + $0x48] sm:$0xff]
  %v35 = vld [vmem:[%s1 + $0x50] sm:$0xff]
  %v36 = vld [vmem:[%s1 + $0x58] sm:$0xff]
  %v37 = vld [vmem:[%s1 + $0x60] sm:$0xff]
  %v38 = vld [vmem:[%s1 + $0x68] sm:$0xff]
  %v39 = vld [vmem:[%s1 + $0x70] sm:$0xff]
  %v40 = vld [vmem:[%s1 + $0x78] sm:$0xff]
  %v41 = vld [vmem:[%s1 + $0x80] sm:$0xff]
  %v42 = vld [vmem:[%s1 + $0x88] sm:$0xff]
  %v43 = vld [vmem:[%s1 + $0x90] sm:$0xff]
  %v44 = vld [vmem:[%s1 + $0x98] sm:$0xff]
  %v45 = vld [vmem:[%s1 + $0xa0] sm:$0xff]
  %v46 = vld [vmem:[%s1 + $0xa8] sm:$0xff]
  %v47 = vld [vmem:[%s1 + $0xb0] sm:$0xff]
  %v48 = vld [vmem:[%s1 + $0xb8] sm:$0xff]
  %v49 = vld [vmem:[%s1 + $0xc0] sm:$0xff]
  %v50 = vld [vmem:[%s1 + $0xc8] sm:$0xff]
  %v51 = vld [vmem:[%s1 + $0xd0] sm:$0xff]
  %v52 = vld [vmem:[%s1 + $0xd8] sm:$0xff]
  %v53 = vld [vmem:[%s1 + $0xe0] sm:$0xff]
  %v54 = vld [vmem:[%s1 + $0xe8] sm:$0xff]
  %v55 = vld [vmem:[%s1 + $0xf0] sm:$0xff]
  %v56 = vld [vmem:[%s1 + $0xf8] sm:$0xff]
  %57 = vmatprep.subr.mxu0 0.0
  %58 = vmatpush1.msra.mxu0 %v25
  %59 = vmatprep.subr.mxu0 0.0
  %60 = vmatpush1.msra.mxu0 %v26
  %61 = vmatprep.subr.mxu0 0.0
  %62 = vmatpush1.msra.mxu0 %v27
  %63 = vmatprep.subr.mxu0 0.0
  %64 = vmatpush1.msra.mxu0 %v28
  %65 = vmatprep.subr.mxu0 0.0
  %66 = vmatpush1.msra.mxu0 %v29
  %67 = vmatprep.subr.mxu0 0.0
  %68 = vmatpush1.msra.mxu0 %v30
  %69 = vmatprep.subr.mxu0 0.0
  %70 = vmatpush1.msra.mxu0 %v31
  %71 = vmatprep.subr.mxu0 0.0
  %72 = vmatpush1.msra.mxu0 %v32
  %73 = vmatprep.subr.mxu0 0.0
  %74 = vmatpush1.msra.mxu0 %v33
  %75 = vmatprep.subr.mxu0 0.0
  %76 = vmatpush1.msra.mxu0 %v34
  %77 = vmatprep.subr.mxu0 0.0
  %78 = vmatpush1.msra.mxu0 %v35
  %79 = vmatprep.subr.mxu0 0.0
  %80 = vmatpush1.msra.mxu0 %v36
  %81 = vmatprep.subr.mxu0 0.0
  %82 = vmatpush1.msra.mxu0 %v37
  %83 = vmatprep.subr.mxu0 0.0
  %84 = vmatpush1.msra.mxu0 %v38
  %85 = vmatprep.subr.mxu0 0.0
  %86 = vmatpush1.msra.mxu0 %v39
  %87 = vmatprep.subr.mxu0 0.0
  %88 = vmatpush1.msra.mxu0 %v40
  %89 = vmatprep.subr.mxu0 0.0
  %90 = vmatpush1.msra.mxu0 %v41
  %91 = vmatprep.subr.mxu0 0.0
  %92 = vmatpush1.msra.mxu0 %v42
  %93 = vmatprep.subr.mxu0 0.0
  %94 = vmatpush1.msra.mxu0 %v43
  %95 = vmatprep.subr.mxu0 0.0
  %96 = vmatpush1.msra.mxu0 %v44
  %97 = vmatprep.subr.mxu0 0.0
  %98 = vmatpush1.msra.mxu0 %v45
  %99 = vmatprep.subr.mxu0 0.0
  %100 = vmatpush1.msra.mxu0 %v46
  %101 = vmatprep.subr.mxu0 0.0
  %102 = vmatpush1.msra.mxu0 %v47
  %103 = vmatprep.subr.mxu0 0.0
  %104 = vmatpush1.msra.mxu0 %v48
  %105 = vmatprep.subr.mxu0 0.0
  %106 = vmatpush1.msra.mxu0 %v49
  %107 = vmatprep.subr.mxu0 0.0
  %108 = vmatpush1.msra.mxu0 %v50
  %109 = vmatprep.subr.mxu0 0.0
  %110 = vmatpush1.msra.mxu0 %v51
  %111 = vmatprep.subr.mxu0 0.0
  %112 = vmatpush1.msra.mxu0 %v52
  %113 = vmatprep.subr.mxu0 0.0
  %114 = vmatpush1.msra.mxu0 %v53
  %115 = vmatprep.subr.mxu0 0.0
  %116 = vmatpush1.msra.mxu0 %v54
  %117 = vmatprep.subr.mxu0 0.0
  %118 = vmatpush1.msra.mxu0 %v55
  %119 = vmatprep.subr.mxu0 0.0
  %120 = vmatpush1.msra.mxu0 %v56
  %121 = vmatprep.mubr.f32.mxu0 %v21
  %122 = vmatmul.mubr.f32.gmra.mrb[0].mxu0 %v19
  %v123 = vpop.f32.mrb[0].mxu0
  %v124 = vadd.f32 0.0, %v123
  %v125 = vpop.f32.mrb[0].mxu0
  %126 = vdwg.mxu0
  %v127 = vrcp.pop %v24
  %v128 = vmul.f32 %v124, %v127
  %vm129 = vcmask 15360
  %130 = vst.msk [vmem:[%s2] sm:$0xff] %vm129, %v128
  // Predicated region
  $region10: #{tpu_custom_call.1} parent=0 // pred_check
    _
  $region11: #{tpu_custom_call.1} parent=0 // pred_check_branch
    %132 = sbr.rel (0) target = $region13
  $region12: #{tpu_custom_call.1} parent=0 // pred_region
    _
  $region13: #{tpu_custom_call.1} parent=0 // pred_fallthru
    _
  // Predicated region
  $region14: #{tpu_custom_call.1} parent=0 // pred_check
    _
  $region15: #{tpu_custom_call.1} parent=0 // pred_check_branch
    %134 = sbr.rel (0) target = $region17
  $region16: #{tpu_custom_call.1} parent=0 // pred_region
    _
  $region17: #{tpu_custom_call.1} parent=0 // pred_fallthru
    _

</llo_original>
